<compile_context>
chip_gen: v5e
topology: v5e:2x2
jax: 0.10.0
libtpu: 0.0.40
codegen_flags: <defaults>
</compile_context>

<pallas_src>
import numpy as np
import jax
import jax.numpy as jnp
from jax.experimental import pallas as pl
from jax.experimental.pallas import tpu as pltpu


def _attn_decoder_kernel(
    emb_ref,      # (T, H)     gathered embedding rows (dropout = identity in eval)
    hid0_ref,     # (1, H)     initial hidden state
    enc_ref,      # (L, H)     encoder outputs
    w_e_ref,      # (H, L+H)   fused [w_attn_emb | w_comb_emb]
    w_h_ref,      # (H, L+3H)  fused [w_attn_hid | w_gru_hh]
    w_ca_ref,     # (H, H)     attn_combine, attention half
    w_ih_ref,     # (H, 3H)    GRU input weights
    w_out_ref,    # (H, V)     output projection
    b_e_ref,      # (1, L+H)   [zeros(L) | b_comb]
    b_h_ref,      # (1, L+3H)  [b_attn   | b_hh  ]
    b_i_ref,      # (1, 3H)    b_ih
    b_o_ref,      # (1, V)     b_out
    out_ref,      # (T, PACKW) packed [logp | h | attn | pad]  (lane-dense, one store)
):
    T, H = emb_ref.shape
    L = enc_ref.shape[0]
    V = w_out_ref.shape[1]
    packw = out_ref.shape[1]

    enc = enc_ref[...]
    w_h = w_h_ref[...]
    w_ca = w_ca_ref[...]
    w_ih = w_ih_ref[...]
    b_h = b_h_ref[...]
    b_i = b_i_ref[...]

    # ---- Prologue: token-side projection for ALL steps, batched over T (M=T). ----
    e_proj_all = jnp.dot(emb_ref[...], w_e_ref[...],
                         preferred_element_type=jnp.float32) + b_e_ref[...]     # (T, L+H)

    hid = hid0_ref[...]                                       # (1, H), carried in registers
    h_steps = []
    a_steps = []

    # Fully-unrolled recurrence: T is small & static, indices are static, so no
    # dynamic masked stores and no per-grid-step pipeline overhead.
    for t in range(T):
        e_proj = e_proj_all[t:t + 1, :]                                         # (1, L+H)

        # Fused hidden-side projection: [attention scores half | GRU gh (b_hh folded)].
        h_proj = jnp.dot(hid, w_h, preferred_element_type=jnp.float32) + b_h    # (1, L+3H)

        # --- attention: softmax over L encoder slots ---------------------------
        scores = e_proj[:, :L] + h_proj[:, :L]                                  # (1, L)
        m = jnp.max(scores, axis=1, keepdims=True)
        ex = jnp.exp(scores - m)
        s = jnp.sum(ex, axis=1, keepdims=True)
        # EUP reciprocal estimate + one Newton step (~f32 accurate); both run in
        # the shadow of the ex@enc matmul below (normalization is deferred).
        r0 = pl.reciprocal(s, approx=True)
        r = r0 * (2.0 - s * r0)

        unnorm_applied = jnp.dot(ex, enc, preferred_element_type=jnp.float32)   # (1, H)
        attn_applied = unnorm_applied * r
        attn_w = ex * r                                                         # (1, L)

        # --- attn_combine + relu ----------------------------------------------
        comb = e_proj[:, L:] + jnp.dot(attn_applied, w_ca,
                                       preferred_element_type=jnp.float32)      # (1, H)
        x = jnp.maximum(comb, 0.0)

        # --- GRU cell (PyTorch gate order r, z, n); gh was precomputed above ---
        gi = jnp.dot(x, w_ih, preferred_element_type=jnp.float32) + b_i         # (1, 3H)
        gh = h_proj[:, L:]                                                      # (1, 3H)
        rg = jax.nn.sigmoid(gi[:, 0:H] + gh[:, 0:H])
        zg = jax.nn.sigmoid(gi[:, H:2 * H] + gh[:, H:2 * H])
        ng = jnp.tanh(gi[:, 2 * H:] + rg * gh[:, 2 * H:])
        hid = (1.0 - zg) * ng + zg * hid

        h_steps.append(hid)
        a_steps.append(attn_w)

    h_all = jnp.concatenate(h_steps, axis=0)                                    # (T, H)
    a_all = jnp.concatenate(a_steps, axis=0)                                    # (T, L)

    # ---- Epilogue: batched output projection + log_softmax (off the chain). ----
    logits = jnp.dot(h_all, w_out_ref[...],
                     preferred_element_type=jnp.float32) + b_o_ref[...]         # (T, V)
    lm = jnp.max(logits, axis=1, keepdims=True)
    sh = logits - lm
    logp = sh - jnp.log(jnp.sum(jnp.exp(sh), axis=1, keepdims=True))

    pieces = [logp, h_all, a_all]
    pad = packw - (V + H + L)
    if pad:
        pieces.append(jnp.zeros((T, pad), jnp.float32))
    out_ref[...] = jnp.concatenate(pieces, axis=1)            # one lane-dense store


def attn_decoder_decode(tokens, hidden, encoder_outputs, params):
    """Run len(tokens) sequential decode steps (teacher forcing) in ONE pallas_call.

    tokens: (T,) int32; hidden: (1,1,H); encoder_outputs: (L,H).
    Returns (logp (T,V), hidden_per_step (T,H), attn_weights (T,L)).
    """
    H = params["hidden_size"]
    L = params["max_length"]
    V = params["output_size"]
    T = int(tokens.shape[0])
    PACKW = max(128, ((V + H + L + 127) // 128) * 128)

    # Bounds-safe embedding gather in the wrapper (XLA gather), dropout=identity.
    tok = jnp.clip(tokens.astype(jnp.int32), 0, V - 1)
    emb_all = jnp.take(params["embedding"], tok, axis=0).astype(jnp.float32)     # (T, H)
    hid0 = hidden.reshape(1, H).astype(jnp.float32)

    inputs = (emb_all, hid0, encoder_outputs.astype(jnp.float32),
              params["w_e_fused"], params["w_h_fused"], params["w_comb_a"],
              params["w_ih"], params["w_out"],
              params["b_eproj"], params["b_hproj"], params["b_ih"], params["b_out"])

    flops = 2 * (T * H * (L + H)                       # prologue e_proj
                 + T * (H * (L + 3 * H) + L * H + H * H + H * 3 * H)   # recurrence
                 + T * H * V)                          # epilogue out projection
    transcendentals = T * (L + 3 * H + V + 4)
    bytes_accessed = (sum(int(a.size) * a.dtype.itemsize for a in inputs)
                      + 4 * T * PACKW)

    vmem = pl.BlockSpec(memory_space=pltpu.MemorySpace.VMEM)
    packed = pl.pallas_call(
        _attn_decoder_kernel,
        out_shape=jax.ShapeDtypeStruct((T, PACKW), jnp.float32),
        in_specs=[vmem] * len(inputs),
        out_specs=vmem,
        cost_estimate=pl.CostEstimate(flops=flops,
                                      transcendentals=transcendentals,
                                      bytes_accessed=bytes_accessed),
    )(*inputs)

    logp = packed[:, :V]
    newh = packed[:, V:V + H]
    attn_w = packed[:, V + H:V + H + L]
    return logp, newh, attn_w


def attn_decoder_forward(token, hidden, encoder_outputs, params):
    """Single decode step — identical semantics to AttnDecoderRNN.forward (eval mode)."""
    H = params["hidden_size"]
    tokens = jnp.asarray(token, jnp.int32).reshape(1)
    logp, newh, attn_w = attn_decoder_decode(tokens, hidden, encoder_outputs, params)
    return logp, newh.reshape(1, 1, H), attn_w


def make_params(key, hidden_size, output_size, max_length):
    """Deterministic synthetic parameters with the shapes nn.* would create.
    Linear weights are stored pre-transposed (in_features, out_features)."""
    H, V, L = hidden_size, output_size, max_length
    ks = jax.random.split(key, 12)
    u = lambda k, shape, s=0.1: jax.random.uniform(k, shape, jnp.float32, -s, s)
    p = {
        "hidden_size": H, "output_size": V, "max_length": L,
        "embedding": u(ks[0], (V, H), 1.0),
        # attn: Linear(2H -> L), split into embedded-half and hidden-half
        "w_attn_e": u(ks[1], (H, L)),
        "w_attn_h": u(ks[2], (H, L)),
        "b_attn":   u(ks[3], (1, L)),
        # attn_combine: Linear(2H -> H), split into embedded-half and attn-half
        "w_comb_e": u(ks[4], (H, H)),
        "w_comb_a": u(ks[5], (H, H)),
        "b_comb":   u(ks[6], (1, H)),
        # GRU weight_ih / weight_hh stored transposed as (H, 3H); gate order r,z,n
        "w_ih": u(ks[7], (H, 3 * H)),
        "w_hh": u(ks[8], (H, 3 * H)),
        "b_ih": u(ks[9], (1, 3 * H)),
        "b_hh": u(ks[10], (1, 3 * H)),
        # out: Linear(H -> V) stored transposed
        "w_out": u(ks[11], (H, V)),
        "b_out": u(jax.random.fold_in(key, 7), (1, V)),
    }
    # Fused shared-LHS weights; biases kept as separate whole operands
    # (no misaligned in-kernel bias slicing).
    p["w_e_fused"] = jnp.concatenate([p["w_attn_e"], p["w_comb_e"]], axis=1)   # (H, L+H)
    p["w_h_fused"] = jnp.concatenate([p["w_attn_h"], p["w_hh"]], axis=1)       # (H, L+3H)
    p["b_eproj"] = jnp.concatenate([jnp.zeros((1, L), jnp.float32), p["b_comb"]], axis=1)
    p["b_hproj"] = jnp.concatenate([p["b_attn"], p["b_hh"]], axis=1)
    return p


def reference_forward(token, hidden, encoder_outputs, p):
    """Pure-JAX reference mirroring the PyTorch forward (eval-mode dropout)."""
    H = p["hidden_size"]
    emb = p["embedding"][token][None, :]
    hid = hidden.reshape(1, H)
    scores = emb @ p["w_attn_e"] + hid @ p["w_attn_h"] + p["b_attn"]
    attn_w = jax.nn.softmax(scores, axis=1)
    attn_applied = attn_w @ encoder_outputs
    x = jax.nn.relu(emb @ p["w_comb_e"] + attn_applied @ p["w_comb_a"] + p["b_comb"])
    gi = x @ p["w_ih"] + p["b_ih"]
    gh = hid @ p["w_hh"] + p["b_hh"]
    r = jax.nn.sigmoid(gi[:, 0:H] + gh[:, 0:H])
    z = jax.nn.sigmoid(gi[:, H:2 * H] + gh[:, H:2 * H])
    n = jnp.tanh(gi[:, 2 * H:] + r * gh[:, 2 * H:])
    h_new = (1.0 - z) * n + z * hid
    logits = h_new @ p["w_out"] + p["b_out"]
    logp = jax.nn.log_softmax(logits, axis=1)
    return logp, h_new.reshape(1, 1, H), attn_w


def reference_decode(tokens, hidden, encoder_outputs, p):
    logps, hs, attns = [], [], []
    h = hidden
    for t in range(int(tokens.shape[0])):
        lp, h, aw = reference_forward(tokens[t], h, encoder_outputs, p)
        logps.append(lp)
        hs.append(h.reshape(1, -1))
        attns.append(aw)
    return (jnp.concatenate(logps, 0), jnp.concatenate(hs, 0),
            jnp.concatenate(attns, 0))


if __name__ == "__main__":
    HIDDEN = 32
    OUTPUT = 64          # vocab size
    MAX_LENGTH = 10
    T = 6                # decode steps fused into one kernel launch

    key = jax.random.PRNGKey(0)
    kp, kh, ke, kt = jax.random.split(key, 4)

    params = make_params(kp, HIDDEN, OUTPUT, MAX_LENGTH)
    hidden = jax.random.normal(kh, (1, 1, HIDDEN), jnp.float32)
    encoder_outputs = jax.random.normal(ke, (MAX_LENGTH, HIDDEN), jnp.float32)
    tokens = jax.random.randint(kt, (T,), 0, OUTPUT, jnp.int32)

    # Tolerances: loosened from 1e-5 because the attention softmax uses the EUP
    # approximate reciprocal (one Newton refinement restores ~f32 accuracy) and
    # normalization is applied after the score@enc matmul (different FP ordering).
    ATOL_1, RTOL_1 = 1e-4, 1e-4     # single step
    ATOL_T, RTOL_T = 2e-4, 2e-4     # T-step sequence (errors compound mildly)

    # ---- single decode step (exact AttnDecoderRNN.forward semantics) -------
    token = jnp.int32(5)
    logp, new_hidden, attn_w = attn_decoder_forward(token, hidden, encoder_outputs, params)
    jax.block_until_ready((logp, new_hidden, attn_w))

    ref_logp, ref_hidden, ref_attn = reference_forward(token, hidden, encoder_outputs, params)
    assert logp.shape == (1, OUTPUT)
    assert new_hidden.shape == (1, 1, HIDDEN)
    assert attn_w.shape == (1, MAX_LENGTH)
    np.testing.assert_allclose(np.asarray(logp), np.asarray(ref_logp), atol=ATOL_1, rtol=RTOL_1)
    np.testing.assert_allclose(np.asarray(new_hidden), np.asarray(ref_hidden), atol=ATOL_1, rtol=RTOL_1)
    np.testing.assert_allclose(np.asarray(attn_w), np.asarray(ref_attn), atol=ATOL_1, rtol=RTOL_1)

    # ---- T-step teacher-forced decode in ONE kernel launch ------------------
    logp_seq, h_seq, attn_seq = attn_decoder_decode(tokens, hidden, encoder_outputs, params)
    jax.block_until_ready((logp_seq, h_seq, attn_seq))

    r_logp, r_h, r_attn = reference_decode(tokens, hidden, encoder_outputs, params)
    assert logp_seq.shape == (T, OUTPUT)
    assert h_seq.shape == (T, HIDDEN)
    assert attn_seq.shape == (T, MAX_LENGTH)
    np.testing.assert_allclose(np.asarray(logp_seq), np.asarray(r_logp), atol=ATOL_T, rtol=RTOL_T)
    np.testing.assert_allclose(np.asarray(h_seq), np.asarray(r_h), atol=ATOL_T, rtol=RTOL_T)
    np.testing.assert_allclose(np.asarray(attn_seq), np.asarray(r_attn), atol=ATOL_T, rtol=RTOL_T)

    print("KERNEL_OK")
</pallas_src>

<mosaic_0001>
module attributes {stable_mosaic.version = 11 : i64} {
  func.func @_attn_decoder_kernel(%arg0: memref<1x32xf32, #tpu.memory_space<vmem>>, %arg1: memref<1x32xf32, #tpu.memory_space<vmem>>, %arg2: memref<10x32xf32, #tpu.memory_space<vmem>>, %arg3: memref<32x42xf32, #tpu.memory_space<vmem>>, %arg4: memref<32x106xf32, #tpu.memory_space<vmem>>, %arg5: memref<32x32xf32, #tpu.memory_space<vmem>>, %arg6: memref<32x96xf32, #tpu.memory_space<vmem>>, %arg7: memref<32x64xf32, #tpu.memory_space<vmem>>, %arg8: memref<1x42xf32, #tpu.memory_space<vmem>>, %arg9: memref<1x106xf32, #tpu.memory_space<vmem>>, %arg10: memref<1x96xf32, #tpu.memory_space<vmem>>, %arg11: memref<1x64xf32, #tpu.memory_space<vmem>>, %arg12: memref<1x128xf32, #tpu.memory_space<vmem>>) attributes {dimension_semantics = [], scalar_prefetch = 0 : i64, scratch_operands = 0 : i64, tpu.core_type = #tpu.core_type<tc>} {
    %c0 = arith.constant 0 : index
    %c0_0 = arith.constant 0 : index
    %0 = vector.load %arg2[%c0, %c0_0] : memref<10x32xf32, #tpu.memory_space<vmem>>, vector<10x32xf32>
    %c0_1 = arith.constant 0 : index
    %c0_2 = arith.constant 0 : index
    %1 = vector.load %arg4[%c0_1, %c0_2] : memref<32x106xf32, #tpu.memory_space<vmem>>, vector<32x106xf32>
    %c0_3 = arith.constant 0 : index
    %c0_4 = arith.constant 0 : index
    %2 = vector.load %arg5[%c0_3, %c0_4] : memref<32x32xf32, #tpu.memory_space<vmem>>, vector<32x32xf32>
    %c0_5 = arith.constant 0 : index
    %c0_6 = arith.constant 0 : index
    %3 = vector.load %arg6[%c0_5, %c0_6] : memref<32x96xf32, #tpu.memory_space<vmem>>, vector<32x96xf32>
    %c0_7 = arith.constant 0 : index
    %c0_8 = arith.constant 0 : index
    %4 = vector.load %arg9[%c0_7, %c0_8] : memref<1x106xf32, #tpu.memory_space<vmem>>, vector<1x106xf32>
    %c0_9 = arith.constant 0 : index
    %c0_10 = arith.constant 0 : index
    %5 = vector.load %arg10[%c0_9, %c0_10] : memref<1x96xf32, #tpu.memory_space<vmem>>, vector<1x96xf32>
    %c0_11 = arith.constant 0 : index
    %c0_12 = arith.constant 0 : index
    %6 = vector.load %arg0[%c0_11, %c0_12] : memref<1x32xf32, #tpu.memory_space<vmem>>, vector<1x32xf32>
    %c0_13 = arith.constant 0 : index
    %c0_14 = arith.constant 0 : index
    %7 = vector.load %arg3[%c0_13, %c0_14] : memref<32x42xf32, #tpu.memory_space<vmem>>, vector<32x42xf32>
    %cst = arith.constant dense<0.000000e+00> : vector<1x42xf32>
    %8 = tpu.matmul %6, %7, %cst {dimension_numbers = #tpu.dot_dimension_numbers<[1], [0], [0], [1], [0, 0, 1, 1], [], []>} : vector<1x32xf32>, vector<32x42xf32>, vector<1x42xf32> -> vector<1x42xf32>
    %c0_15 = arith.constant 0 : index
    %c0_16 = arith.constant 0 : index
    %9 = vector.load %arg8[%c0_15, %c0_16] : memref<1x42xf32, #tpu.memory_space<vmem>>, vector<1x42xf32>
    %10 = arith.addf %8, %9 : vector<1x42xf32>
    %c0_17 = arith.constant 0 : index
    %c0_18 = arith.constant 0 : index
    %11 = vector.load %arg1[%c0_17, %c0_18] : memref<1x32xf32, #tpu.memory_space<vmem>>, vector<1x32xf32>
    %cst_19 = arith.constant dense<0.000000e+00> : vector<1x106xf32>
    %12 = tpu.matmul %11, %1, %cst_19 {dimension_numbers = #tpu.dot_dimension_numbers<[1], [0], [0], [1], [0, 0, 1, 1], [], []>} : vector<1x32xf32>, vector<32x106xf32>, vector<1x106xf32> -> vector<1x106xf32>
    %13 = arith.addf %12, %4 : vector<1x106xf32>
    %14 = vector.extract_strided_slice %10 {offsets = [0, 0], sizes = [1, 10], strides = [1, 1]} : vector<1x42xf32> to vector<1x10xf32>
    %15 = vector.extract_strided_slice %13 {offsets = [0, 0], sizes = [1, 10], strides = [1, 1]} : vector<1x106xf32> to vector<1x10xf32>
    %16 = arith.addf %14, %15 : vector<1x10xf32>
    %cst_20 = arith.constant dense<0xFF800000> : vector<1xf32>
    %17 = vector.multi_reduction <maximumf>, %16, %cst_20 [1] : vector<1x10xf32> to vector<1xf32>
    %18 = vector.shape_cast %17 : vector<1xf32> to vector<1x1xf32>
    %19 = vector.broadcast %18 : vector<1x1xf32> to vector<1x10xf32>
    %20 = arith.subf %16, %19 : vector<1x10xf32>
    %21 = math.exp %20 : vector<1x10xf32>
    %cst_21 = arith.constant dense<0.000000e+00> : vector<1xf32>
    %22 = vector.multi_reduction <add>, %21, %cst_21 [1] : vector<1x10xf32> to vector<1xf32>
    %23 = vector.shape_cast %22 : vector<1xf32> to vector<1x1xf32>
    %24 = tpu.reciprocal %23 {approx = true} : vector<1x1xf32> -> vector<1x1xf32>
    %25 = arith.mulf %23, %24 : vector<1x1xf32>
    %cst_22 = arith.constant 2.000000e+00 : f32
    %26 = vector.broadcast %cst_22 : f32 to vector<1x1xf32>
    %27 = arith.subf %26, %25 : vector<1x1xf32>
    %28 = arith.mulf %24, %27 : vector<1x1xf32>
    %cst_23 = arith.constant dense<0.000000e+00> : vector<1x32xf32>
    %29 = tpu.matmul %21, %0, %cst_23 {dimension_numbers = #tpu.dot_dimension_numbers<[1], [0], [0], [1], [0, 0, 1, 1], [], []>} : vector<1x10xf32>, vector<10x32xf32>, vector<1x32xf32> -> vector<1x32xf32>
    %30 = vector.broadcast %28 : vector<1x1xf32> to vector<1x32xf32>
    %31 = arith.mulf %29, %30 : vector<1x32xf32>
    %32 = vector.broadcast %28 : vector<1x1xf32> to vector<1x10xf32>
    %33 = arith.mulf %21, %32 : vector<1x10xf32>
    %34 = vector.extract_strided_slice %10 {offsets = [0, 10], sizes = [1, 32], strides = [1, 1]} : vector<1x42xf32> to vector<1x32xf32>
    %cst_24 = arith.constant dense<0.000000e+00> : vector<1x32xf32>
    %35 = tpu.matmul %31, %2, %cst_24 {dimension_numbers = #tpu.dot_dimension_numbers<[1], [0], [0], [1], [0, 0, 1, 1], [], []>} : vector<1x32xf32>, vector<32x32xf32>, vector<1x32xf32> -> vector<1x32xf32>
    %36 = arith.addf %34, %35 : vector<1x32xf32>
    %cst_25 = arith.constant 0.000000e+00 : f32
    %37 = vector.broadcast %cst_25 : f32 to vector<1x32xf32>
    %38 = arith.maximumf %36, %37 : vector<1x32xf32>
    %cst_26 = arith.constant dense<0.000000e+00> : vector<1x96xf32>
    %39 = tpu.matmul %38, %3, %cst_26 {dimension_numbers = #tpu.dot_dimension_numbers<[1], [0], [0], [1], [0, 0, 1, 1], [], []>} : vector<1x32xf32>, vector<32x96xf32>, vector<1x96xf32> -> vector<1x96xf32>
    %40 = arith.addf %39, %5 : vector<1x96xf32>
    %41 = vector.extract_strided_slice %13 {offsets = [0, 10], sizes = [1, 96], strides = [1, 1]} : vector<1x106xf32> to vector<1x96xf32>
    %42 = vector.extract_strided_slice %40 {offsets = [0, 0], sizes = [1, 32], strides = [1, 1]} : vector<1x96xf32> to vector<1x32xf32>
    %43 = vector.extract_strided_slice %41 {offsets = [0, 0], sizes = [1, 32], strides = [1, 1]} : vector<1x96xf32> to vector<1x32xf32>
    %44 = arith.addf %42, %43 : vector<1x32xf32>
    %45 = arith.negf %44 : vector<1x32xf32>
    %46 = math.exp %45 : vector<1x32xf32>
    %cst_27 = arith.constant 1.000000e+00 : f32
    %47 = vector.broadcast %cst_27 : f32 to vector<1x32xf32>
    %48 = arith.addf %47, %46 : vector<1x32xf32>
    %49 = arith.divf %47, %48 : vector<1x32xf32>
    %50 = vector.extract_strided_slice %40 {offsets = [0, 32], sizes = [1, 32], strides = [1, 1]} : vector<1x96xf32> to vector<1x32xf32>
    %51 = vector.extract_strided_slice %41 {offsets = [0, 32], sizes = [1, 32], strides = [1, 1]} : vector<1x96xf32> to vector<1x32xf32>
    %52 = arith.addf %50, %51 : vector<1x32xf32>
    %53 = arith.negf %52 : vector<1x32xf32>
    %54 = math.exp %53 : vector<1x32xf32>
    %cst_28 = arith.constant 1.000000e+00 : f32
    %55 = vector.broadcast %cst_28 : f32 to vector<1x32xf32>
    %56 = arith.addf %55, %54 : vector<1x32xf32>
    %57 = arith.divf %55, %56 : vector<1x32xf32>
    %58 = vector.extract_strided_slice %40 {offsets = [0, 64], sizes = [1, 32], strides = [1, 1]} : vector<1x96xf32> to vector<1x32xf32>
    %59 = vector.extract_strided_slice %41 {offsets = [0, 64], sizes = [1, 32], strides = [1, 1]} : vector<1x96xf32> to vector<1x32xf32>
    %60 = arith.mulf %49, %59 : vector<1x32xf32>
    %61 = arith.addf %58, %60 : vector<1x32xf32>
    %62 = math.tanh %61 : vector<1x32xf32>
    %cst_29 = arith.constant 1.000000e+00 : f32
    %63 = vector.broadcast %cst_29 : f32 to vector<1x32xf32>
    %64 = arith.subf %63, %57 : vector<1x32xf32>
    %65 = arith.mulf %64, %62 : vector<1x32xf32>
    %66 = arith.mulf %57, %11 : vector<1x32xf32>
    %67 = arith.addf %65, %66 : vector<1x32xf32>
    %c0_30 = arith.constant 0 : index
    %c0_31 = arith.constant 0 : index
    %68 = vector.load %arg7[%c0_30, %c0_31] : memref<32x64xf32, #tpu.memory_space<vmem>>, vector<32x64xf32>
    %cst_32 = arith.constant dense<0.000000e+00> : vector<1x64xf32>
    %69 = tpu.matmul %67, %68, %cst_32 {dimension_numbers = #tpu.dot_dimension_numbers<[1], [0], [0], [1], [0, 0, 1, 1], [], []>} : vector<1x32xf32>, vector<32x64xf32>, vector<1x64xf32> -> vector<1x64xf32>
    %c0_33 = arith.constant 0 : index
    %c0_34 = arith.constant 0 : index
    %70 = vector.load %arg11[%c0_33, %c0_34] : memref<1x64xf32, #tpu.memory_space<vmem>>, vector<1x64xf32>
    %71 = arith.addf %69, %70 : vector<1x64xf32>
    %cst_35 = arith.constant dense<0xFF800000> : vector<1xf32>
    %72 = vector.multi_reduction <maximumf>, %71, %cst_35 [1] : vector<1x64xf32> to vector<1xf32>
    %73 = vector.shape_cast %72 : vector<1xf32> to vector<1x1xf32>
    %74 = vector.broadcast %73 : vector<1x1xf32> to vector<1x64xf32>
    %75 = arith.subf %71, %74 : vector<1x64xf32>
    %76 = math.exp %75 : vector<1x64xf32>
    %cst_36 = arith.constant dense<0.000000e+00> : vector<1xf32>
    %77 = vector.multi_reduction <add>, %76, %cst_36 [1] : vector<1x64xf32> to vector<1xf32>
    %78 = vector.shape_cast %77 : vector<1xf32> to vector<1x1xf32>
    %79 = math.log %78 : vector<1x1xf32>
    %80 = vector.broadcast %79 : vector<1x1xf32> to vector<1x64xf32>
    %81 = arith.subf %75, %80 : vector<1x64xf32>
    %cst_37 = arith.constant 0.000000e+00 : f32
    %82 = vector.broadcast %cst_37 : f32 to vector<1x22xf32>
    %83 = tpu.concatenate %81, %67, %33, %82 in 1 : vector<1x64xf32>, vector<1x32xf32>, vector<1x10xf32>, vector<1x22xf32> -> vector<1x128xf32>
    %c0_38 = arith.constant 0 : index
    %c0_39 = arith.constant 0 : index
    %84 = vector.load %arg12[%c0_38, %c0_39] : memref<1x128xf32, #tpu.memory_space<vmem>>, vector<1x128xf32>
    tpu.vector_store %arg12[%c0_38, %c0_39], %83 {strides = array<i32>} : memref<1x128xf32, #tpu.memory_space<vmem>>, vector<1x128xf32>,
    return
  }
}

</mosaic_0001>

<llo_original>
// kernel: tpu_custom_call.1
$region0: #{tpu_custom_call.1}
  #allocation0 [shape = 'u32[]', space=smem, size = 0x4, offset = 0x4, fixed_abs, tag = 'smem constant byte address 0x4 - core index']
  #allocation1 [shape = 'u32[72,128]{1,0:T(1,128)}', space=vmem, size = 0x9000, scoped, tag = 'internal scratch']
  %s0 = inlined_call_operand.hbm [shape: f32[1,32], index: 0, kind: input, shape index: {}]
  %s1 = inlined_call_operand.hbm [shape: f32[1,32], index: 1, kind: input, shape index: {}]
  %s2 = inlined_call_operand.hbm [shape: f32[10,32], index: 2, kind: input, shape index: {}]
  %s3 = inlined_call_operand.hbm [shape: f32[32,42], index: 3, kind: input, shape index: {}]
  %s4 = inlined_call_operand.hbm [shape: f32[32,106], index: 4, kind: input, shape index: {}]
  %s5 = inlined_call_operand.hbm [shape: f32[32,32], index: 5, kind: input, shape index: {}]
  %s6 = inlined_call_operand.hbm [shape: f32[32,96], index: 6, kind: input, shape index: {}]
  %s7 = inlined_call_operand.hbm [shape: f32[32,64], index: 7, kind: input, shape index: {}]
  %s8 = inlined_call_operand.vmem [shape: f32[1,42], index: 8, kind: input, shape index: {}]
  %s9 = inlined_call_operand.vmem [shape: f32[1,106], index: 9, kind: input, shape index: {}]
  %s10 = inlined_call_operand.vmem [shape: f32[1,96], index: 10, kind: input, shape index: {}]
  %s11 = inlined_call_operand.vmem [shape: f32[1,64], index: 11, kind: input, shape index: {}]
  %s12 = inlined_call_operand.hbm [shape: f32[1,128], index: 12, kind: output, shape index: {}]
  %s13 = sld [smem:[#allocation0]]
  $region90: #{tpu_custom_call.1} parent=0
    _
  %s15 = ssub.s32 1, %s13
  %s16 = scalar_select 0, %s15, %s13
  $region1: #{tpu_custom_call.1} parent=0
    #allocation2 [shape = 'u8[512]{0}', space=vmem, size = 0x400, scoped, tag = 'input window, operand 0, single buffered']
    #allocation3 [shape = 's32[1]{0}', space=sflag, size = 0x4, scoped, tag = 'scoped memory for tpu_custom_call.1']
    #allocation4 [shape = 's32[1]{0}', space=sflag, size = 0x4, scoped, tag = 'scoped memory for tpu_custom_call.1']
    #allocation5 [shape = 'u8[512]{0}', space=vmem, size = 0x400, scoped, tag = 'input window, operand 1, single buffered']
    #allocation6 [shape = 's32[1]{0}', space=sflag, size = 0x4, scoped, tag = 'scoped memory for tpu_custom_call.1']
    #allocation7 [shape = 'u8[8192]{0}', space=vmem, size = 0x2000, scoped, tag = 'input window, operand 2, single buffered']
    #allocation8 [shape = 'u8[16384]{0}', space=vmem, size = 0x4000, scoped, tag = 'input window, operand 3, single buffered']
    #allocation9 [shape = 's32[1]{0}', space=sflag, size = 0x4, scoped, tag = 'scoped memory for tpu_custom_call.1']
    #allocation10 [shape = 'u8[16384]{0}', space=vmem, size = 0x4000, scoped, tag = 'input window, operand 4, single buffered']
    #allocation11 [shape = 'u8[16384]{0}', space=vmem, size = 0x4000, scoped, tag = 'input window, operand 5, single buffered']
    #allocation12 [shape = 's32[1]{0}', space=sflag, size = 0x4, scoped, tag = 'scoped memory for tpu_custom_call.1']
    #allocation13 [shape = 'u8[16384]{0}', space=vmem, size = 0x4000, scoped, tag = 'input window, operand 6, single buffered']
    #allocation14 [shape = 'u8[16384]{0}', space=vmem, size = 0x4000, scoped, tag = 'input window, operand 7, single buffered']
    #allocation15 [shape = 's32[1]{0}', space=sflag, size = 0x4, scoped, tag = 'scoped memory for tpu_custom_call.1']
    #allocation16 [shape = 'u8[512]{0}', space=vmem, size = 0x400, scoped, tag = 'output window, operand 0, single buffered']
    %17 = vsyncpa [#allocation3], 0
    %18 = vsyncpa [#allocation6], 0
    %19 = vsyncpa [#allocation9], 0
    %20 = vsyncpa [#allocation12], 0
    %21 = vsyncpa [#allocation15], 0
    %22 = vsyncpa [#allocation4], 0
    // Predicated region
    $region2: #{tpu_custom_call.1} parent=1 // pred_check
      _
    $region3: #{tpu_custom_call.1} parent=1 // pred_check_branch
      %24 = sbr.rel (0) target = $region5
    $region4: #{tpu_custom_call.1} parent=1 // pred_region
      %26 = vsyncadd [#allocation3], 0
      %s28 = sshll.u32 %s0, 4
      %s29 = int_to_ptr.hbm [resolvable:$true] %s28
      %s30 = sshll.u32 [#allocation2], 4
      %s31 = int_to_ptr.vmem [resolvable:$true] %s30
      %33 = dma.hbm_to_vmem [thread:$0]  %s29, 16, %s31, [#allocation3]
    $region5: #{tpu_custom_call.1} parent=1 // pred_fallthru
      _
    // Predicated region
    $region6: #{tpu_custom_call.1} parent=1 // pred_check
      _
    $region7: #{tpu_custom_call.1} parent=1 // pred_check_branch
      %35 = sbr.rel (0) target = $region9
    $region8: #{tpu_custom_call.1} parent=1 // pred_region
      %37 = vsyncadd [#allocation6], 0
      %s39 = sshll.u32 %s1, 4
      %s40 = int_to_ptr.hbm [resolvable:$true] %s39
      %s41 = sshll.u32 [#allocation5], 4
      %s42 = int_to_ptr.vmem [resolvable:$true] %s41
      %44 = dma.hbm_to_vmem [thread:$0]  %s40, 16, %s42, [#allocation6]
    $region9: #{tpu_custom_call.1} parent=1 // pred_fallthru
      _
    // Predicated region
    $region10: #{tpu_custom_call.1} parent=1 // pred_check
      _
    $region11: #{tpu_custom_call.1} parent=1 // pred_check_branch
      %46 = sbr.rel (0) target = $region13
    $region12: #{tpu_custom_call.1} parent=1 // pred_region
      %48 = vsyncadd [#allocation6], 0
      %s49 = sshll.u32 %s2, 4
      %s50 = int_to_ptr.hbm [resolvable:$true] %s49
      %s51 = sshll.u32 [#allocation7], 4
      %s52 = int_to_ptr.vmem [resolvable:$true] %s51
      %57 = dma.hbm_to_vmem [thread:$0]  %s50, 256, %s52, [#allocation6], 128, 128, 8
    $region13: #{tpu_custom_call.1} parent=1 // pred_fallthru
      _
    // Predicated region
    $region14: #{tpu_custom_call.1} parent=1 // pred_check
      _
    $region15: #{tpu_custom_call.1} parent=1 // pred_check_branch
      %59 = sbr.rel (0) target = $region17
    $region16: #{tpu_custom_call.1} parent=1 // pred_region
      %61 = vsyncadd [#allocation9], 0
      %s62 = sshll.u32 %s3, 4
      %s63 = int_to_ptr.hbm [resolvable:$true] %s62
      %s64 = sshll.u32 [#allocation8], 4
      %s65 = int_to_ptr.vmem [resolvable:$true] %s64
      %70 = dma.hbm_to_vmem [thread:$0]  %s63, 512, %s65, [#allocation9], 128, 128, 8
    $region17: #{tpu_custom_call.1} parent=1 // pred_fallthru
      _
    // Predicated region
    $region18: #{tpu_custom_call.1} parent=1 // pred_check
      _
    $region19: #{tpu_custom_call.1} parent=1 // pred_check_branch
      %72 = sbr.rel (0) target = $region21
    $region20: #{tpu_custom_call.1} parent=1 // pred_region
      %74 = vsyncadd [#allocation9], 0
      %s75 = sshll.u32 %s4, 4
      %s76 = int_to_ptr.hbm [resolvable:$true] %s75
      %s77 = sshll.u32 [#allocation10], 4
      %s78 = int_to_ptr.vmem [resolvable:$true] %s77
      %83 = dma.hbm_to_vmem [thread:$0]  %s76, 512, %s78, [#allocation9], 128, 128, 8
    $region21: #{tpu_custom_call.1} parent=1 // pred_fallthru
      _
    // Predicated region
    $region22: #{tpu_custom_call.1} parent=1 // pred_check
      _
    $region23: #{tpu_custom_call.1} parent=1 // pred_check_branch
      %85 = sbr.rel (0) target = $region25
    $region24: #{tpu_custom_call.1} parent=1 // pred_region
      %87 = vsyncadd [#allocation12], 0
      %s88 = sshll.u32 %s5, 4
      %s89 = int_to_ptr.hbm [resolvable:$true] %s88
      %s90 = sshll.u32 [#allocation11], 4
      %s91 = int_to_ptr.vmem [resolvable:$true] %s90
      %96 = dma.hbm_to_vmem [thread:$0]  %s89, 512, %s91, [#allocation12], 128, 128, 8
    $region25: #{tpu_custom_call.1} parent=1 // pred_fallthru
      _
    // Predicated region
    $region26: #{tpu_custom_call.1} parent=1 // pred_check
      _
    $region27: #{tpu_custom_call.1} parent=1 // pred_check_branch
      %98 = sbr.rel (0) target = $region29
    $region28: #{tpu_custom_call.1} parent=1 // pred_region
      %100 = vsyncadd [#allocation12], 0
      %s101 = sshll.u32 %s6, 4
      %s102 = int_to_ptr.hbm [resolvable:$true] %s101
      %s103 = sshll.u32 [#allocation13], 4
      %s104 = int_to_ptr.vmem [resolvable:$true] %s103
      %109 = dma.hbm_to_vmem [thread:$0]  %s102, 512, %s104, [#allocation12], 128, 128, 8
    $region29: #{tpu_custom_call.1} parent=1 // pred_fallthru
      _
    // Predicated region
    $region30: #{tpu_custom_call.1} parent=1 // pred_check
      _
    $region31: #{tpu_custom_call.1} parent=1 // pred_check_branch
      %111 = sbr.rel (0) target = $region33
    $region32: #{tpu_custom_call.1} parent=1 // pred_region
      %113 = vsyncadd [#allocation15], 0
      %s114 = sshll.u32 %s7, 4
      %s115 = int_to_ptr.hbm [resolvable:$true] %s114
      %s116 = sshll.u32 [#allocation14], 4
      %s117 = int_to_ptr.vmem [resolvable:$true] %s116
      %122 = dma.hbm_to_vmem [thread:$0]  %s115, 512, %s117, [#allocation15], 128, 128, 8
    $region33: #{tpu_custom_call.1} parent=1 // pred_fallthru
      _
    // Predicated region
    $region34: #{tpu_custom_call.1} parent=1 // pred_check
      _
    $region35: #{tpu_custom_call.1} parent=1 // pred_check_branch
      %124 = sbr.rel (0) target = $region37
    $region36: #{tpu_custom_call.1} parent=1 // pred_region
      _
    $region37: #{tpu_custom_call.1} parent=1 // pred_fallthru
      _
    // Predicated region
    $region38: #{tpu_custom_call.1} parent=1 // pred_check
      _
    $region39: #{tpu_custom_call.1} parent=1 // pred_check_branch
      %126 = sbr.rel (0) target = $region41
    $region40: #{tpu_custom_call.1} parent=1 // pred_region
      _
    $region41: #{tpu_custom_call.1} parent=1 // pred_fallthru
      _
    // Predicated region
    $region42: #{tpu_custom_call.1} parent=1 // pred_check
      _
    $region43: #{tpu_custom_call.1} parent=1 // pred_check_branch
      %128 = sbr.rel (0) target = $region45
    $region44: #{tpu_custom_call.1} parent=1 // pred_region
      _
    $region45: #{tpu_custom_call.1} parent=1 // pred_fallthru
      _
    // Predicated region
    $region46: #{tpu_custom_call.1} parent=1 // pred_check
      _
    $region47: #{tpu_custom_call.1} parent=1 // pred_check_branch
      %130 = sbr.rel (0) target = $region49
    $region48: #{tpu_custom_call.1} parent=1 // pred_region
      _
    $region49: #{tpu_custom_call.1} parent=1 // pred_fallthru
      _
    // Predicated region
    $region50: #{tpu_custom_call.1} parent=1 // pred_check
      _
    $region51: #{tpu_custom_call.1} parent=1 // pred_check_branch
      %132 = sbr.rel (0) target = $region53
    $region52: #{tpu_custom_call.1} parent=1 // pred_region
      %134 = dma.done [#allocation3], 16
    $region53: #{tpu_custom_call.1} parent=1 // pred_fallthru
      _
    // Predicated region
    $region54: #{tpu_custom_call.1} parent=1 // pred_check
      _
    $region55: #{tpu_custom_call.1} parent=1 // pred_check_branch
      %136 = sbr.rel (0) target = $region57
    $region56: #{tpu_custom_call.1} parent=1 // pred_region
      %138 = dma.done [#allocation6], 16
    $region57: #{tpu_custom_call.1} parent=1 // pred_fallthru
      _
    // Predicated region
    $region58: #{tpu_custom_call.1} parent=1 // pred_check
      _
    $region59: #{tpu_custom_call.1} parent=1 // pred_check_branch
      %140 = sbr.rel (0) target = $region61
    $region60: #{tpu_custom_call.1} parent=1 // pred_region
      %142 = dma.done [#allocation6], 256
    $region61: #{tpu_custom_call.1} parent=1 // pred_fallthru
      _
    // Predicated region
    $region62: #{tpu_custom_call.1} parent=1 // pred_check
      _
    $region63: #{tpu_custom_call.1} parent=1 // pred_check_branch
      %144 = sbr.rel (0) target = $region65
    $region64: #{tpu_custom_call.1} parent=1 // pred_region
      %146 = dma.done [#allocation9], 512
    $region65: #{tpu_custom_call.1} parent=1 // pred_fallthru
      _
    // Predicated region
    $region66: #{tpu_custom_call.1} parent=1 // pred_check
      _
    $region67: #{tpu_custom_call.1} parent=1 // pred_check_branch
      %148 = sbr.rel (0) target = $region69
    $region68: #{tpu_custom_call.1} parent=1 // pred_region
      %150 = dma.done [#allocation9], 512
    $region69: #{tpu_custom_call.1} parent=1 // pred_fallthru
      _
    // Predicated region
    $region70: #{tpu_custom_call.1} parent=1 // pred_check
      _
    $region71: #{tpu_custom_call.1} parent=1 // pred_check_branch
      %152 = sbr.rel (0) target = $region73
    $region72: #{tpu_custom_call.1} parent=1 // pred_region
      %154 = dma.done [#allocation12], 512
    $region73: #{tpu_custom_call.1} parent=1 // pred_fallthru
      _
    // Predicated region
    $region74: #{tpu_custom_call.1} parent=1 // pred_check
      _
    $region75: #{tpu_custom_call.1} parent=1 // pred_check_branch
      %156 = sbr.rel (0) target = $region77
    $region76: #{tpu_custom_call.1} parent=1 // pred_region
      %158 = dma.done [#allocation12], 512
    $region77: #{tpu_custom_call.1} parent=1 // pred_fallthru
      _
    // Predicated region
    $region78: #{tpu_custom_call.1} parent=1 // pred_check
      _
    $region79: #{tpu_custom_call.1} parent=1 // pred_check_branch
      %160 = sbr.rel (0) target = $region81
    $region80: #{tpu_custom_call.1} parent=1 // pred_region
      %162 = dma.done [#allocation15], 512
    $region81: #{tpu_custom_call.1} parent=1 // pred_fallthru
      _
    %v163 = vld [vmem:[#allocation7] sm:$0xff]
    %v164 = vld [vmem:[#allocation7 + $0x8] sm:$0x3]
    %v165 = vld [vmem:[#allocation10] sm:$0xff]
    %v166 = vld [vmem:[#allocation10 + $0x8] sm:$0xff]
    %v167 = vld [vmem:[#allocation10 + $0x10] sm:$0xff]
    %v168 = vld [vmem:[#allocation10 + $0x18] sm:$0xff]
    %v169 = vld [vmem:[#allocation11] sm:$0xff]
    %v170 = vld [vmem:[#allocation11 + $0x8] sm:$0xff]
    %v171 = vld [vmem:[#allocation11 + $0x10] sm:$0xff]
    %v172 = vld [vmem:[#allocation11 + $0x18] sm:$0xff]
    %v173 = vld [vmem:[#allocation13] sm:$0xff]
    %v174 = vld [vmem:[#allocation13 + $0x8] sm:$0xff]
    %v175 = vld [vmem:[#allocation13 + $0x10] sm:$0xff]
    %v176 = vld [vmem:[#allocation13 + $0x18] sm:$0xff]
    %v177 = vld [vmem:[%s9] sm:$0x1]
    %v178 = vld [vmem:[%s10] sm:$0x1]
    %v179 = vld [vmem:[#allocation2] sm:$0x1]
    %v180 = vld [vmem:[#allocation8] sm:$0xff]
    %v181 = vld [vmem:[#allocation8 + $0x8] sm:$0xff]
    %v182 = vld [vmem:[#allocation8 + $0x10] sm:$0xff]
    %v183 = vld [vmem:[#allocation8 + $0x18] sm:$0xff]
    %v184 = vld [vmem:[%s8] sm:$0x1]
    %vm185 = vcmask 261120
    %v187 = vsel %vm185, %v179, 0
    %189 = vmatpush.msra.mxu0 0.0
    %190 = vmatpush.msra.mxu0 0.0
    %191 = vmatpush.msra.mxu0 0.0
    %192 = vmatpush.msra.mxu0 0.0
    %193 = vmatpush.msra.mxu0 0.0
    %194 = vmatpush.msra.mxu0 0.0
    %195 = vmatpush.msra.mxu0 0.0
    %196 = vmatpush.msra.mxu0 0.0
    %197 = vmatpush.msra.mxu0 0.0
    %198 = vmatpush.msra.mxu0 0.0
    %199 = vmatpush.msra.mxu0 0.0
    %200 = vmatpush.msra.mxu0 0.0
    %201 = vmatpush.msra.mxu0 %v183
    %202 = vmatpush.msra.mxu0 %v182
    %203 = vmatpush.msra.mxu0 %v181
    %204 = vmatpush.msra.mxu0 %v180
    %205 = vmatmul.f32.gmra.mxu0 %v187
    %v206 = vpop.f32.mrf.mxu0
    %v207 = vadd.f32 %v184, %v206
    %208 = vdwg.mxu0
    %v209 = vld [vmem:[#allocation5] sm:$0x1]
    %v211 = vsel %vm185, %v209, 0
    %213 = vmatpush.msra.mxu0 0.0
    %214 = vmatpush.msra.mxu0 0.0
    %215 = vmatpush.msra.mxu0 0.0
    %216 = vmatpush.msra.mxu0 0.0
    %217 = vmatpush.msra.mxu0 0.0
    %218 = vmatpush.msra.mxu0 0.0
    %219 = vmatpush.msra.mxu0 0.0
    %220 = vmatpush.msra.mxu0 0.0
    %221 = vmatpush.msra.mxu0 0.0
    %222 = vmatpush.msra.mxu0 0.0
    %223 = vmatpush.msra.mxu0 0.0
    %224 = vmatpush.msra.mxu0 0.0
    %225 = vmatpush.msra.mxu0 %v168
    %226 = vmatpush.msra.mxu0 %v167
    %227 = vmatpush.msra.mxu0 %v166
    %228 = vmatpush.msra.mxu0 %v165
    %229 = vmatmul.f32.gmra.mxu0 %v211
    %v230 = vpop.f32.mrf.mxu0
    %v231 = vadd.f32 %v177, %v230
    %232 = vdwg.mxu0
    %v233 = vadd.f32 %v207, %v231
    %vm234 = vcmask 73728
    %v235 = vsel %vm234, %v233, -inf
    %236 = vmax.xlane.f32.xlu0 %v235
    %v237 = vpop.xlane.xlu0 %236
    %v238 = vsub.f32 %v233, %v237
    %v239 = vmul.f32 %v238, 1.442695
    %v240 = vpow.pop %v239
    %v241 = vsel %vm234, %v240, 0.0
    %242 = vadd.xlane.f32.xlu0 %v241
    %v243 = vpop.xlane.xlu0 %242
    %v244 = vrcp.pop %v243
    %v245 = vmul.f32 %v243, %v244
    %v246 = vsub.f32 2.0, %v245
    %v247 = vmul.f32 %v244, %v246
    %vm248 = vcmask 80896
    %v250 = vsel %vm248, %v240, 0
    %vm252 = vcmask 1041408
    %v254 = vsel %vm252, %v164, 0
    %256 = vmatpush.msra.mxu0 0.0
    %257 = vmatpush.msra.mxu0 0.0
    %258 = vmatpush.msra.mxu0 0.0
    %259 = vmatpush.msra.mxu0 0.0
    %260 = vmatpush.msra.mxu0 0.0
    %261 = vmatpush.msra.mxu0 0.0
    %262 = vmatpush.msra.mxu0 0.0
    %263 = vmatpush.msra.mxu0 0.0
    %264 = vmatpush.msra.mxu0 0.0
    %265 = vmatpush.msra.mxu0 0.0
    %266 = vmatpush.msra.mxu0 0.0
    %267 = vmatpush.msra.mxu0 0.0
    %268 = vmatpush.msra.mxu0 0.0
    %269 = vmatpush.msra.mxu0 0.0
    %270 = vmatpush.msra.mxu0 %v254
    %271 = vmatpush.msra.mxu0 %v163
    %272 = vmatmul.f32.gmra.mxu0 %v250
    %v273 = vpop.f32.mrf.mxu0
    %v274 = vadd.f32 0.0, %v273
    %275 = vdwg.mxu0
    %v276 = vmul.f32 %v274, %v247
    %v277 = vmul.f32 %v240, %v247
    %v279 = vsel %vm185, %v276, 0
    %281 = vmatpush.msra.mxu0 0.0
    %282 = vmatpush.msra.mxu0 0.0
    %283 = vmatpush.msra.mxu0 0.0
    %284 = vmatpush.msra.mxu0 0.0
    %285 = vmatpush.msra.mxu0 0.0
    %286 = vmatpush.msra.mxu0 0.0
    %287 = vmatpush.msra.mxu0 0.0
    %288 = vmatpush.msra.mxu0 0.0
    %289 = vmatpush.msra.mxu0 0.0
    %290 = vmatpush.msra.mxu0 0.0
    %291 = vmatpush.msra.mxu0 0.0
    %292 = vmatpush.msra.mxu0 0.0
    %293 = vmatpush.msra.mxu0 %v172
    %294 = vmatpush.msra.mxu0 %v171
    %295 = vmatpush.msra.mxu0 %v170
    %296 = vmatpush.msra.mxu0 %v169
    %297 = vmatmul.f32.gmra.mxu0 %v279
    %v298 = vpop.f32.mrf.mxu0
    %v299 = vadd.f32 0.0, %v298
    %300 = vdwg.mxu0
    %302 = vrot.lane.b32.xlu0 %v299, 10
    %v303 = vpop.permute.xlu0 %302
    %v305 = vadd.f32 %v207, %v303
    %v306 = vmax.f32 %v305, 0.0
    %308 = vrot.lane.b32.xlu0 %v306, 118
    %v309 = vpop.permute.xlu0 %308
    %v310 = vsel %vm185, %v309, 0
    %312 = vmatpush.msra.mxu0 0.0
    %313 = vmatpush.msra.mxu0 0.0
    %314 = vmatpush.msra.mxu0 0.0
    %315 = vmatpush.msra.mxu0 0.0
    %316 = vmatpush.msra.mxu0 0.0
    %317 = vmatpush.msra.mxu0 0.0
    %318 = vmatpush.msra.mxu0 0.0
    %319 = vmatpush.msra.mxu0 0.0
    %320 = vmatpush.msra.mxu0 0.0
    %321 = vmatpush.msra.mxu0 0.0
    %322 = vmatpush.msra.mxu0 0.0
    %323 = vmatpush.msra.mxu0 0.0
    %324 = vmatpush.msra.mxu0 %v176
    %325 = vmatpush.msra.mxu0 %v175
    %326 = vmatpush.msra.mxu0 %v174
    %327 = vmatpush.msra.mxu0 %v173
    %328 = vmatmul.f32.gmra.mxu0 %v310
    %v329 = vpop.f32.mrf.mxu0
    %v330 = vadd.f32 %v178, %v329
    %331 = vdwg.mxu0
    %333 = vrot.lane.b32.xlu0 %v231, 118
    %v334 = vpop.permute.xlu0 %333
    %v336 = vadd.f32 %v330, %v334
    %v337 = vxor.u32 %v336, 2147483648
    %v338 = vmul.f32 %v337, 1.442695
    %v339 = vpow.pop %v338
    %v340 = vadd.f32 %v339, 1.0
    %v341 = vrcp.pop %v340
    %v342 = vmul.f32 %v340, %v341
    %v343 = vsub.f32 1.0, %v342
    %v344 = vmul.f32 %v341, %v343
    %v345 = vadd.f32 %v341, %v344
    %vm346 = vweird.f32 %v340
    %vm347 = vweird.f32 %v341
    %vm348 = vmor %vm346, %vm347
    %v349 = vsel %vm348, %v341, %v345
    %v350 = vand.u32 2147483647, %v340
    %vm351 = vcmp.eq.f32.partialorder %v350, 8.507059e+37
    %v352 = vand.u32 %v340, 2147483648
    %v353 = vor.u32 1.1754944e-38, %v352
    %v354 = vsel %vm351, %v353, %v349
    %v355 = vmul.f32 1.0, %v354
    %356 = vrot.lane.b32.xlu0 %v231, 54
    %v357 = vpop.permute.xlu0 %356
    %v359 = vmul.f32 %v355, %v357
    %361 = vrot.lane.b32.xlu0 %v359, 64
    %v362 = vpop.permute.xlu0 %361
    %v364 = vadd.f32 %v330, %v362
    %v365 = vtanh.pop %v364
    %v366 = vsub.f32 1.0, %v355
    %368 = vrot.lane.b32.xlu0 %v365, 96
    %v369 = vpop.permute.xlu0 %368
    %v371 = vmul.f32 %v366, %v369
    %v372 = vperm.slane %v209, 0
    %373 = vrot.lane.b32.xlu0 %v372, 32
    %v374 = vpop.permute.xlu0 %373
    %v376 = vmul.f32 %v355, %v374
    %v377 = vadd.f32 %v371, %v376
    %v378 = vld [vmem:[#allocation14] sm:$0xff]
    %v379 = vld [vmem:[#allocation14 + $0x8] sm:$0xff]
    %v380 = vld [vmem:[#allocation14 + $0x10] sm:$0xff]
    %v381 = vld [vmem:[#allocation14 + $0x18] sm:$0xff]
    %v382 = vld [vmem:[%s11] sm:$0x1]
    %384 = vrot.lane.b32.xlu0 %v377, 96
    %v385 = vpop.permute.xlu0 %384
    %v386 = vsel %vm185, %v385, 0
    %388 = vmatpush.msra.mxu0 0.0
    %389 = vmatpush.msra.mxu0 0.0
    %390 = vmatpush.msra.mxu0 0.0
    %391 = vmatpush.msra.mxu0 0.0
    %392 = vmatpush.msra.mxu0 0.0
    %393 = vmatpush.msra.mxu0 0.0
    %394 = vmatpush.msra.mxu0 0.0
    %395 = vmatpush.msra.mxu0 0.0
    %396 = vmatpush.msra.mxu0 0.0
    %397 = vmatpush.msra.mxu0 0.0
    %398 = vmatpush.msra.mxu0 0.0
    %399 = vmatpush.msra.mxu0 0.0
    %400 = vmatpush.msra.mxu0 %v381
    %401 = vmatpush.msra.mxu0 %v380
    %402 = vmatpush.msra.mxu0 %v379
    %403 = vmatpush.msra.mxu0 %v378
    %404 = vmatmul.f32.gmra.mxu0 %v386
    %v405 = vpop.f32.mrf.mxu0
    %v406 = vadd.f32 %v382, %v405
    %407 = vdwg.mxu0
    %vm408 = vcmask 516096
    %v409 = vsel %vm408, %v406, -inf
    %410 = vmax.xlane.f32.xlu0 %v409
    %v411 = vpop.xlane.xlu0 %410
    %v412 = vsub.f32 %v406, %v411
    %v413 = vmul.f32 %v412, 1.442695
    %v414 = vpow.pop %v413
    %v415 = vsel %vm408, %v414, 0.0
    %416 = vadd.xlane.f32.xlu0 %v415
    %v417 = vpop.xlane.xlu0 %416
    %v418 = vlog2.pop %v417
    %v419 = vmul.f32 %v418, 0.6931472
    %v420 = vsub.f32 %v412, %v419
    %421 = vrot.lane.b32.xlu0 %v377, 32
    %v422 = vpop.permute.xlu0 %421
    %425 = vrot.lane.b32.xlu0 %v277, 96
    %v426 = vpop.permute.xlu0 %425
    %vm428 = vcmask 523264
    %v429 = vsel %vm428, %v420, %v422
    %vm430 = vcmask 785408
    %v431 = vsel %vm430, %v429, %v426
    %vm432 = vcmask 867328
    %v433 = vsel %vm432, %v431, 0.0
    %434 = vst [vmem:[#allocation16] sm:$0x1] %v433
    // Predicated region
    $region82: #{tpu_custom_call.1} parent=1 // pred_check
      _
    $region83: #{tpu_custom_call.1} parent=1 // pred_check_branch
      %436 = sbr.rel (0) target = $region85
    $region84: #{tpu_custom_call.1} parent=1 // pred_region
      %438 = vsyncadd [#allocation4], 0
      %s440 = sshll.u32 [#allocation16], 4
      %s441 = int_to_ptr.vmem [resolvable:$true] %s440
      %s442 = sshll.u32 %s12, 4
      %s443 = int_to_ptr.hbm [resolvable:$true] %s442
      %445 = dma.vmem_to_hbm [thread:$0]  %s441, 16, %s443, [#allocation4]
    $region85: #{tpu_custom_call.1} parent=1 // pred_fallthru
      _
    // Predicated region
    $region86: #{tpu_custom_call.1} parent=1 // pred_check
      _
    $region87: #{tpu_custom_call.1} parent=1 // pred_check_branch
      %447 = sbr.rel (0) target = $region89
    $region88: #{tpu_custom_call.1} parent=1 // pred_region
      %449 = dma.done [#allocation4], 16
    $region89: #{tpu_custom_call.1} parent=1 // pred_fallthru
      _
    %450 = vsyncpa [#allocation3], 1
    %451 = vsyncpa [#allocation6], 1
    %452 = vsyncpa [#allocation9], 1
    %453 = vsyncpa [#allocation12], 1
    %454 = vsyncpa [#allocation15], 1
    %455 = vsyncpa [#allocation4], 1

</llo_original>
